<compile_context>
chip_gen: v7x
topology: tpu7x:2x2x1
jax: 0.10.0
libtpu: 0.0.40
codegen_flags: <defaults>
</compile_context>

<pallas_src>
import functools

import jax
import jax.numpy as jnp
from jax import lax
from jax.experimental import pallas as pl
from jax.experimental.pallas import tpu as pltpu

SUB = 8          # sublanes per batch tile
LANE = 128       # lanes per batch tile
BTILE = SUB * LANE
CHUNK = 8        # time steps per statically-unrolled chunk (re-sweep 8 vs 16)


def _kalman_kernel(z_ref, med_ref, r_ref, q_ref, p0_ref, o_ref,
                   xh_sc, p_sc, *, chunk: int):
    # z_ref, o_ref          : [TBLK, NT, SUB, LANE]  time-major measurement / output block
    # med/r/q/p0_ref        : [NT, SUB, LANE]        per-row stats, (P0,Q,R) pre-scaled
    # xh_sc, p_sc           : [NT, SUB, LANE]        VMEM carry of (xhat, P) across time blocks
    @pl.when(pl.program_id(1) == 0)
    def _init():
        xh_sc[...] = med_ref[...]      # xhat[:, 0] = median
        p_sc[...] = p0_ref[...]        # P[:, 0]    = 1 (scaled)

    R = r_ref[...]
    Q = q_ref[...]
    n_chunks = z_ref.shape[0] // chunk     # static

    def gains(p):
        # Division-free Kalman gain recurrence for one chunk.  P is carried as
        # n/d (renormalised so d = 1 at chunk entry); the serial chain per step
        # is 3 VPU ops, K_k = s_k/d_k is computed off the chain.
        n = p
        d = jnp.ones_like(p)
        ks = []
        for _ in range(chunk):
            s = n + Q * d              # Pminus_k  (numerator)
            d = s + R * d              # Pminus_k + R  (new denominator)
            n = R * s                  # P_k       (numerator)
            ks.append(s / d)           # K_k, off the serial n/d chain
        return tuple(ks), n / d        # renormalised P at chunk exit

    def apply_chunk(xh, ks, base):
        # Data chain: xhat_k = (1-K_k)*xhat_{k-1} + K_k*z_k  -> mul + add per
        # step; rows are stored as they are produced (keeps vreg pressure low).
        for j in range(chunk):
            k = ks[j]
            b = k * z_ref[base + j]
            xh = (1.0 - k) * xh + b
            o_ref[base + j] = xh
        return xh

    # Software pipeline: gains for chunk c overlap the xhat chain of chunk c-1.
    ks, p = gains(p_sc[...])
    xh = xh_sc[...]

    def body(c, carry):
        xh, p, ks_prev = carry
        base = pl.multiple_of((c - 1) * chunk, chunk)
        ks_next, p = gains(p)                 # chunk c   (independent chain)
        xh = apply_chunk(xh, ks_prev, base)   # chunk c-1 (data chain)
        return xh, p, ks_next

    if n_chunks > 1:
        xh, p, ks = lax.fori_loop(1, n_chunks, body, (xh, p, ks))
    xh = apply_chunk(xh, ks, (n_chunks - 1) * chunk)   # epilogue: last chunk

    xh_sc[...] = xh
    p_sc[...] = p


def _pack_rows(v, n_btiles):
    return v.reshape(n_btiles, SUB, LANE)


def kalman_filter_time_major(x_tm, r_scale, q=1e-05):
    """Kalman filter on time-major data.  x_tm: [T, B] -> filtered [T, B].

    This entry point avoids the two HBM transpose passes of the [B, T] API:
    the wrapper only pads and does free reshapes around the kernel.
    """
    x_tm = jnp.asarray(x_tm, jnp.float32)
    T, B = x_tm.shape

    # ---- per-row statistics (torch semantics: lower median, unbiased var) ----
    med = jnp.sort(x_tm, axis=0)[(T - 1) // 2]                 # [B]
    if T > 1:
        var = jnp.var(x_tm, axis=0, ddof=1)
    else:
        var = jnp.ones((B,), jnp.float32)                      # R/Q unused when T == 1
    R = var * jnp.float32(r_scale)
    Q = var / 1000.0 if q is None else jnp.full((B,), jnp.float32(q))

    if T == 1:
        return med[None, :]

    # Joint rescale of (P0, Q, R) by 1/c (Kalman gains are exactly invariant);
    # keeps the division-free homogeneous recurrence far from f32 overflow.
    c = jnp.maximum(jnp.maximum(R, Q), 1.0)
    r_s, q_s, p0_s = R / c, Q / c, 1.0 / c

    # ---- tiling ----
    N = T - 1                                   # update steps (z[0] is never used)
    n_btiles = pl.cdiv(B, BTILE)
    Bpad = n_btiles * BTILE
    # (8,128)-tiles per block: >1 interleaves independent recurrence chains but
    # raises vreg pressure; keep (tiles x 3 x CHUNK) well under ~48 live vregs.
    NT = 2 if n_btiles % 2 == 0 else 1
    tblk_cap = max(CHUNK, (1024 // NT) // CHUNK * CHUNK)       # block <= 4 MiB
    TBLK = min(tblk_cap, pl.cdiv(N, CHUNK) * CHUNK)
    n_tblocks = pl.cdiv(N, TBLK)
    N_pad = n_tblocks * TBLK
    n_bblocks = n_btiles // NT

    # ---- pack (pad + free reshapes only; no transposes) ----
    z = jnp.pad(x_tm[1:], ((0, N_pad - N), (0, Bpad - B)))
    z4 = z.reshape(N_pad, n_btiles, SUB, LANE)
    med3 = _pack_rows(jnp.pad(med, (0, Bpad - B)), n_btiles)
    r3 = _pack_rows(jnp.pad(r_s, (0, Bpad - B), constant_values=1.0), n_btiles)
    q3 = _pack_rows(jnp.pad(q_s, (0, Bpad - B), constant_values=1.0), n_btiles)
    p03 = _pack_rows(jnp.pad(p0_s, (0, Bpad - B), constant_values=1.0), n_btiles)

    block_bytes = TBLK * NT * SUB * LANE * 4
    # double-buffered in + out time tiles + headroom; well under 32 MiB (v7x safe)
    vmem_limit = int(min(max(4 * block_bytes + (8 << 20), 16 << 20), 32 << 20))

    kernel = functools.partial(_kalman_kernel, chunk=CHUNK)
    o4 = pl.pallas_call(
        kernel,
        grid=(n_bblocks, n_tblocks),
        in_specs=[
            pl.BlockSpec((TBLK, NT, SUB, LANE), lambda b, t: (t, b, 0, 0)),
            pl.BlockSpec((NT, SUB, LANE), lambda b, t: (b, 0, 0)),
            pl.BlockSpec((NT, SUB, LANE), lambda b, t: (b, 0, 0)),
            pl.BlockSpec((NT, SUB, LANE), lambda b, t: (b, 0, 0)),
            pl.BlockSpec((NT, SUB, LANE), lambda b, t: (b, 0, 0)),
        ],
        out_specs=pl.BlockSpec((TBLK, NT, SUB, LANE), lambda b, t: (t, b, 0, 0)),
        out_shape=jax.ShapeDtypeStruct((N_pad, n_btiles, SUB, LANE), jnp.float32),
        scratch_shapes=[pltpu.VMEM((NT, SUB, LANE), jnp.float32),   # xhat carry
                        pltpu.VMEM((NT, SUB, LANE), jnp.float32)],  # P carry
        input_output_aliases={0: 0},   # write xhat in place over z (safe: each
                                       # block is prefetched before its aliased
                                       # output block is written back)
        compiler_params=pltpu.CompilerParams(
            dimension_semantics=("parallel", "arbitrary"),
            vmem_limit_bytes=vmem_limit,
        ),
    )(z4, med3, r3, q3, p03)

    out_upd = o4.reshape(N_pad, Bpad)[:N, :B]
    return jnp.concatenate([med[None, :], out_upd], axis=0)


def kalman_filter(in_data, r_scale, q=1e-05):
    """Drop-in equivalent of the PyTorch module: in_data [B, T] -> [B, T].

    NOTE: the two transposes below are exactly the extra HBM passes that
    `kalman_filter_time_major` avoids; prefer the time-major entry point when
    the caller can produce / consume [T, B] data.
    """
    x = jnp.asarray(in_data, jnp.float32)
    return kalman_filter_time_major(x.T, r_scale, q=q).T


def _reference(in_data, r_scale, q=1e-05):
    """Pure-JAX reference mirroring the PyTorch loop (per-row semantics)."""
    x = jnp.asarray(in_data, jnp.float32)
    B, T = x.shape
    var = jnp.var(x, axis=1, ddof=1)
    R = var * r_scale
    Q = var / 1000.0 if q is None else jnp.full((B,), q, jnp.float32)
    med = jnp.sort(x, axis=1)[:, (T - 1) // 2]

    def step(carry, z_k):
        xhat_prev, P_prev = carry
        Pminus = P_prev + Q
        K = Pminus / (Pminus + R)
        xhat = xhat_prev + K * (z_k - xhat_prev)
        P = (1.0 - K) * Pminus
        return (xhat, P), xhat

    (_, _), xs = lax.scan(step, (med, jnp.ones((B,), jnp.float32)), x.T[1:])
    return jnp.concatenate([med[None, :], xs], axis=0).T


if __name__ == "__main__":
    key = jax.random.PRNGKey(0)
    r_scale = 4.0

    # Main config: synthetic noisy measurements of a slowly varying signal.
    B, T = 8, 128
    k1, k2 = jax.random.split(key)
    base = jnp.cumsum(0.05 * jax.random.normal(k1, (B, T)), axis=1)
    in_data = (base + 0.5 * jax.random.normal(k2, (B, T))).astype(jnp.float32)

    out = jax.block_until_ready(kalman_filter(in_data, r_scale=r_scale, q=1e-05))
    ref = _reference(in_data, r_scale=r_scale, q=1e-05)
    assert out.shape == (B, T)
    assert jnp.allclose(out, ref, atol=1e-4, rtol=1e-4), float(
        jnp.max(jnp.abs(out - ref)))

    # Ragged config exercises the batch/time padding paths.
    B2, T2 = 3, 37
    k3, k4 = jax.random.split(k2)
    x2 = (jnp.cumsum(0.1 * jax.random.normal(k3, (B2, T2)), axis=1)
          + 0.3 * jax.random.normal(k4, (B2, T2))).astype(jnp.float32)
    out2 = jax.block_until_ready(kalman_filter(x2, r_scale=2.0, q=1e-05))
    ref2 = _reference(x2, r_scale=2.0, q=1e-05)
    assert out2.shape == (B2, T2)
    assert jnp.allclose(out2, ref2, atol=1e-4, rtol=1e-4), float(
        jnp.max(jnp.abs(out2 - ref2)))

    print("KERNEL_OK")
</pallas_src>

<mosaic_0001>
module attributes {stable_mosaic.version = 11 : i64} {
  func.func @_kalman_kernel(%arg0: i32, %arg1: i32, %arg2: memref<128x1x8x128xf32, #tpu.memory_space<vmem>>, %arg3: memref<1x8x128xf32, #tpu.memory_space<vmem>>, %arg4: memref<1x8x128xf32, #tpu.memory_space<vmem>>, %arg5: memref<1x8x128xf32, #tpu.memory_space<vmem>>, %arg6: memref<1x8x128xf32, #tpu.memory_space<vmem>>, %arg7: memref<128x1x8x128xf32, #tpu.memory_space<vmem>>, %arg8: memref<1x8x128xf32, #tpu.memory_space<vmem>>, %arg9: memref<1x8x128xf32, #tpu.memory_space<vmem>>) attributes {dimension_semantics = [#tpu.dimension_semantics<parallel>, #tpu.dimension_semantics<arbitrary>], iteration_bounds = array<i64: 1, 1>, scalar_prefetch = 0 : i64, scratch_operands = 2 : i64, tpu.core_type = #tpu.core_type<tc>, window_params = [{transform_indices = @transform_0, window_bounds = array<i64: 128, 1, 8, 128>}, {transform_indices = @transform_1, window_bounds = array<i64: 1, 8, 128>}, {transform_indices = @transform_2, window_bounds = array<i64: 1, 8, 128>}, {transform_indices = @transform_3, window_bounds = array<i64: 1, 8, 128>}, {transform_indices = @transform_4, window_bounds = array<i64: 1, 8, 128>}, {transform_indices = @transform_5, window_bounds = array<i64: 128, 1, 8, 128>}]} {
    %c0_i32 = arith.constant 0 : i32
    %0 = arith.cmpi eq, %arg1, %c0_i32 : i32
    %1 = arith.extui %0 : i1 to i32
    %c0_i32_0 = arith.constant 0 : i32
    %2 = arith.cmpi ne, %1, %c0_i32_0 : i32
    scf.if %2 {
      %c0_84 = arith.constant 0 : index
      %c0_85 = arith.constant 0 : index
      %c0_86 = arith.constant 0 : index
      %141 = vector.load %arg3[%c0_84, %c0_85, %c0_86] : memref<1x8x128xf32, #tpu.memory_space<vmem>>, vector<1x8x128xf32>
      %c0_87 = arith.constant 0 : index
      %c0_88 = arith.constant 0 : index
      %c0_89 = arith.constant 0 : index
      %142 = vector.load %arg8[%c0_87, %c0_88, %c0_89] : memref<1x8x128xf32, #tpu.memory_space<vmem>>, vector<1x8x128xf32>
      tpu.vector_store %arg8[%c0_87, %c0_88, %c0_89], %141 {strides = array<i32>} : memref<1x8x128xf32, #tpu.memory_space<vmem>>, vector<1x8x128xf32>,
      %c0_90 = arith.constant 0 : index
      %c0_91 = arith.constant 0 : index
      %c0_92 = arith.constant 0 : index
      %143 = vector.load %arg6[%c0_90, %c0_91, %c0_92] : memref<1x8x128xf32, #tpu.memory_space<vmem>>, vector<1x8x128xf32>
      %c0_93 = arith.constant 0 : index
      %c0_94 = arith.constant 0 : index
      %c0_95 = arith.constant 0 : index
      %144 = vector.load %arg9[%c0_93, %c0_94, %c0_95] : memref<1x8x128xf32, #tpu.memory_space<vmem>>, vector<1x8x128xf32>
      tpu.vector_store %arg9[%c0_93, %c0_94, %c0_95], %143 {strides = array<i32>} : memref<1x8x128xf32, #tpu.memory_space<vmem>>, vector<1x8x128xf32>,
    } else {
    }
    %c0 = arith.constant 0 : index
    %c0_1 = arith.constant 0 : index
    %c0_2 = arith.constant 0 : index
    %3 = vector.load %arg4[%c0, %c0_1, %c0_2] : memref<1x8x128xf32, #tpu.memory_space<vmem>>, vector<1x8x128xf32>
    %c0_3 = arith.constant 0 : index
    %c0_4 = arith.constant 0 : index
    %c0_5 = arith.constant 0 : index
    %4 = vector.load %arg5[%c0_3, %c0_4, %c0_5] : memref<1x8x128xf32, #tpu.memory_space<vmem>>, vector<1x8x128xf32>
    %c0_6 = arith.constant 0 : index
    %c0_7 = arith.constant 0 : index
    %c0_8 = arith.constant 0 : index
    %5 = vector.load %arg9[%c0_6, %c0_7, %c0_8] : memref<1x8x128xf32, #tpu.memory_space<vmem>>, vector<1x8x128xf32>
    %cst = arith.constant 1.000000e+00 : f32
    %6 = vector.broadcast %cst : f32 to vector<1x8x128xf32>
    %7 = arith.mulf %4, %6 : vector<1x8x128xf32>
    %8 = arith.addf %5, %7 : vector<1x8x128xf32>
    %9 = arith.mulf %3, %6 : vector<1x8x128xf32>
    %10 = arith.addf %8, %9 : vector<1x8x128xf32>
    %11 = arith.mulf %3, %8 : vector<1x8x128xf32>
    %12 = arith.divf %8, %10 : vector<1x8x128xf32>
    %13 = arith.mulf %4, %10 : vector<1x8x128xf32>
    %14 = arith.addf %11, %13 : vector<1x8x128xf32>
    %15 = arith.mulf %3, %10 : vector<1x8x128xf32>
    %16 = arith.addf %14, %15 : vector<1x8x128xf32>
    %17 = arith.mulf %3, %14 : vector<1x8x128xf32>
    %18 = arith.divf %14, %16 : vector<1x8x128xf32>
    %19 = arith.mulf %4, %16 : vector<1x8x128xf32>
    %20 = arith.addf %17, %19 : vector<1x8x128xf32>
    %21 = arith.mulf %3, %16 : vector<1x8x128xf32>
    %22 = arith.addf %20, %21 : vector<1x8x128xf32>
    %23 = arith.mulf %3, %20 : vector<1x8x128xf32>
    %24 = arith.divf %20, %22 : vector<1x8x128xf32>
    %25 = arith.mulf %4, %22 : vector<1x8x128xf32>
    %26 = arith.addf %23, %25 : vector<1x8x128xf32>
    %27 = arith.mulf %3, %22 : vector<1x8x128xf32>
    %28 = arith.addf %26, %27 : vector<1x8x128xf32>
    %29 = arith.mulf %3, %26 : vector<1x8x128xf32>
    %30 = arith.divf %26, %28 : vector<1x8x128xf32>
    %31 = arith.mulf %4, %28 : vector<1x8x128xf32>
    %32 = arith.addf %29, %31 : vector<1x8x128xf32>
    %33 = arith.mulf %3, %28 : vector<1x8x128xf32>
    %34 = arith.addf %32, %33 : vector<1x8x128xf32>
    %35 = arith.mulf %3, %32 : vector<1x8x128xf32>
    %36 = arith.divf %32, %34 : vector<1x8x128xf32>
    %37 = arith.mulf %4, %34 : vector<1x8x128xf32>
    %38 = arith.addf %35, %37 : vector<1x8x128xf32>
    %39 = arith.mulf %3, %34 : vector<1x8x128xf32>
    %40 = arith.addf %38, %39 : vector<1x8x128xf32>
    %41 = arith.mulf %3, %38 : vector<1x8x128xf32>
    %42 = arith.divf %38, %40 : vector<1x8x128xf32>
    %43 = arith.mulf %4, %40 : vector<1x8x128xf32>
    %44 = arith.addf %41, %43 : vector<1x8x128xf32>
    %45 = arith.mulf %3, %40 : vector<1x8x128xf32>
    %46 = arith.addf %44, %45 : vector<1x8x128xf32>
    %47 = arith.mulf %3, %44 : vector<1x8x128xf32>
    %48 = arith.divf %44, %46 : vector<1x8x128xf32>
    %49 = arith.mulf %4, %46 : vector<1x8x128xf32>
    %50 = arith.addf %47, %49 : vector<1x8x128xf32>
    %51 = arith.mulf %3, %46 : vector<1x8x128xf32>
    %52 = arith.addf %50, %51 : vector<1x8x128xf32>
    %53 = arith.mulf %3, %50 : vector<1x8x128xf32>
    %54 = arith.divf %50, %52 : vector<1x8x128xf32>
    %55 = arith.divf %53, %52 : vector<1x8x128xf32>
    %c0_9 = arith.constant 0 : index
    %c0_10 = arith.constant 0 : index
    %c0_11 = arith.constant 0 : index
    %56 = vector.load %arg8[%c0_9, %c0_10, %c0_11] : memref<1x8x128xf32, #tpu.memory_space<vmem>>, vector<1x8x128xf32>
    %c1_i32 = arith.constant 1 : i32
    %c15_i32 = arith.constant 15 : i32
    %57 = arith.addi %c1_i32, %c15_i32 : i32
    %c1_i32_12 = arith.constant 1 : i32
    %58:10 = scf.for %arg10 = %c1_i32 to %57 step %c1_i32_12 iter_args(%arg11 = %56, %arg12 = %55, %arg13 = %12, %arg14 = %18, %arg15 = %24, %arg16 = %30, %arg17 = %36, %arg18 = %42, %arg19 = %48, %arg20 = %54) -> (vector<1x8x128xf32>, vector<1x8x128xf32>, vector<1x8x128xf32>, vector<1x8x128xf32>, vector<1x8x128xf32>, vector<1x8x128xf32>, vector<1x8x128xf32>, vector<1x8x128xf32>, vector<1x8x128xf32>, vector<1x8x128xf32>)  : i32 {
      %c1_i32_84 = arith.constant 1 : i32
      %141 = arith.subi %arg10, %c1_i32_84 : i32
      %c8_i32 = arith.constant 8 : i32
      %142 = arith.muli %141, %c8_i32 : i32
      %143 = tpu.assume_multiple %142, 8 : i32
      %cst_85 = arith.constant 1.000000e+00 : f32
      %144 = vector.broadcast %cst_85 : f32 to vector<1x8x128xf32>
      %145 = arith.mulf %4, %144 : vector<1x8x128xf32>
      %146 = arith.addf %arg12, %145 : vector<1x8x128xf32>
      %147 = arith.mulf %3, %144 : vector<1x8x128xf32>
      %148 = arith.addf %146, %147 : vector<1x8x128xf32>
      %149 = arith.mulf %3, %146 : vector<1x8x128xf32>
      %150 = arith.divf %146, %148 : vector<1x8x128xf32>
      %151 = arith.mulf %4, %148 : vector<1x8x128xf32>
      %152 = arith.addf %149, %151 : vector<1x8x128xf32>
      %153 = arith.mulf %3, %148 : vector<1x8x128xf32>
      %154 = arith.addf %152, %153 : vector<1x8x128xf32>
      %155 = arith.mulf %3, %152 : vector<1x8x128xf32>
      %156 = arith.divf %152, %154 : vector<1x8x128xf32>
      %157 = arith.mulf %4, %154 : vector<1x8x128xf32>
      %158 = arith.addf %155, %157 : vector<1x8x128xf32>
      %159 = arith.mulf %3, %154 : vector<1x8x128xf32>
      %160 = arith.addf %158, %159 : vector<1x8x128xf32>
      %161 = arith.mulf %3, %158 : vector<1x8x128xf32>
      %162 = arith.divf %158, %160 : vector<1x8x128xf32>
      %163 = arith.mulf %4, %160 : vector<1x8x128xf32>
      %164 = arith.addf %161, %163 : vector<1x8x128xf32>
      %165 = arith.mulf %3, %160 : vector<1x8x128xf32>
      %166 = arith.addf %164, %165 : vector<1x8x128xf32>
      %167 = arith.mulf %3, %164 : vector<1x8x128xf32>
      %168 = arith.divf %164, %166 : vector<1x8x128xf32>
      %169 = arith.mulf %4, %166 : vector<1x8x128xf32>
      %170 = arith.addf %167, %169 : vector<1x8x128xf32>
      %171 = arith.mulf %3, %166 : vector<1x8x128xf32>
      %172 = arith.addf %170, %171 : vector<1x8x128xf32>
      %173 = arith.mulf %3, %170 : vector<1x8x128xf32>
      %174 = arith.divf %170, %172 : vector<1x8x128xf32>
      %175 = arith.mulf %4, %172 : vector<1x8x128xf32>
      %176 = arith.addf %173, %175 : vector<1x8x128xf32>
      %177 = arith.mulf %3, %172 : vector<1x8x128xf32>
      %178 = arith.addf %176, %177 : vector<1x8x128xf32>
      %179 = arith.mulf %3, %176 : vector<1x8x128xf32>
      %180 = arith.divf %176, %178 : vector<1x8x128xf32>
      %181 = arith.mulf %4, %178 : vector<1x8x128xf32>
      %182 = arith.addf %179, %181 : vector<1x8x128xf32>
      %183 = arith.mulf %3, %178 : vector<1x8x128xf32>
      %184 = arith.addf %182, %183 : vector<1x8x128xf32>
      %185 = arith.mulf %3, %182 : vector<1x8x128xf32>
      %186 = arith.divf %182, %184 : vector<1x8x128xf32>
      %187 = arith.mulf %4, %184 : vector<1x8x128xf32>
      %188 = arith.addf %185, %187 : vector<1x8x128xf32>
      %189 = arith.mulf %3, %184 : vector<1x8x128xf32>
      %190 = arith.addf %188, %189 : vector<1x8x128xf32>
      %191 = arith.mulf %3, %188 : vector<1x8x128xf32>
      %192 = arith.divf %188, %190 : vector<1x8x128xf32>
      %193 = arith.divf %191, %190 : vector<1x8x128xf32>
      %c0_i32_86 = arith.constant 0 : i32
      %194 = arith.addi %143, %c0_i32_86 : i32
      %195 = arith.index_cast %194 : i32 to index
      %c0_87 = arith.constant 0 : index
      %c0_88 = arith.constant 0 : index
      %c0_89 = arith.constant 0 : index
      %196 = vector.load %arg2[%195, %c0_87, %c0_88, %c0_89] : memref<128x1x8x128xf32, #tpu.memory_space<vmem>>, vector<1x1x8x128xf32>
      %197 = vector.shape_cast %196 : vector<1x1x8x128xf32> to vector<1x8x128xf32>
      %198 = arith.mulf %arg13, %197 : vector<1x8x128xf32>
      %cst_90 = arith.constant 1.000000e+00 : f32
      %199 = vector.broadcast %cst_90 : f32 to vector<1x8x128xf32>
      %200 = arith.subf %199, %arg13 : vector<1x8x128xf32>
      %201 = arith.mulf %200, %arg11 : vector<1x8x128xf32>
      %202 = arith.addf %201, %198 : vector<1x8x128xf32>
      %c0_i32_91 = arith.constant 0 : i32
      %203 = arith.addi %143, %c0_i32_91 : i32
      %204 = arith.index_cast %203 : i32 to index
      %c0_92 = arith.constant 0 : index
      %c0_93 = arith.constant 0 : index
      %c0_94 = arith.constant 0 : index
      %205 = vector.load %arg7[%204, %c0_92, %c0_93, %c0_94] : memref<128x1x8x128xf32, #tpu.memory_space<vmem>>, vector<1x1x8x128xf32>
      %206 = vector.shape_cast %205 : vector<1x1x8x128xf32> to vector<1x8x128xf32>
      %207 = vector.shape_cast %202 : vector<1x8x128xf32> to vector<1x1x8x128xf32>
      tpu.vector_store %arg7[%204, %c0_92, %c0_93, %c0_94], %207 {strides = array<i32>} : memref<128x1x8x128xf32, #tpu.memory_space<vmem>>, vector<1x1x8x128xf32>,
      %c1_i32_95 = arith.constant 1 : i32
      %208 = arith.addi %143, %c1_i32_95 : i32
      %209 = arith.index_cast %208 : i32 to index
      %c0_96 = arith.constant 0 : index
      %c0_97 = arith.constant 0 : index
      %c0_98 = arith.constant 0 : index
      %210 = vector.load %arg2[%209, %c0_96, %c0_97, %c0_98] : memref<128x1x8x128xf32, #tpu.memory_space<vmem>>, vector<1x1x8x128xf32>
      %211 = vector.shape_cast %210 : vector<1x1x8x128xf32> to vector<1x8x128xf32>
      %212 = arith.mulf %arg14, %211 : vector<1x8x128xf32>
      %cst_99 = arith.constant 1.000000e+00 : f32
      %213 = vector.broadcast %cst_99 : f32 to vector<1x8x128xf32>
      %214 = arith.subf %213, %arg14 : vector<1x8x128xf32>
      %215 = arith.mulf %214, %202 : vector<1x8x128xf32>
      %216 = arith.addf %215, %212 : vector<1x8x128xf32>
      %c1_i32_100 = arith.constant 1 : i32
      %217 = arith.addi %143, %c1_i32_100 : i32
      %218 = arith.index_cast %217 : i32 to index
      %c0_101 = arith.constant 0 : index
      %c0_102 = arith.constant 0 : index
      %c0_103 = arith.constant 0 : index
      %219 = vector.load %arg7[%218, %c0_101, %c0_102, %c0_103] : memref<128x1x8x128xf32, #tpu.memory_space<vmem>>, vector<1x1x8x128xf32>
      %220 = vector.shape_cast %219 : vector<1x1x8x128xf32> to vector<1x8x128xf32>
      %221 = vector.shape_cast %216 : vector<1x8x128xf32> to vector<1x1x8x128xf32>
      tpu.vector_store %arg7[%218, %c0_101, %c0_102, %c0_103], %221 {strides = array<i32>} : memref<128x1x8x128xf32, #tpu.memory_space<vmem>>, vector<1x1x8x128xf32>,
      %c2_i32 = arith.constant 2 : i32
      %222 = arith.addi %143, %c2_i32 : i32
      %223 = arith.index_cast %222 : i32 to index
      %c0_104 = arith.constant 0 : index
      %c0_105 = arith.constant 0 : index
      %c0_106 = arith.constant 0 : index
      %224 = vector.load %arg2[%223, %c0_104, %c0_105, %c0_106] : memref<128x1x8x128xf32, #tpu.memory_space<vmem>>, vector<1x1x8x128xf32>
      %225 = vector.shape_cast %224 : vector<1x1x8x128xf32> to vector<1x8x128xf32>
      %226 = arith.mulf %arg15, %225 : vector<1x8x128xf32>
      %cst_107 = arith.constant 1.000000e+00 : f32
      %227 = vector.broadcast %cst_107 : f32 to vector<1x8x128xf32>
      %228 = arith.subf %227, %arg15 : vector<1x8x128xf32>
      %229 = arith.mulf %228, %216 : vector<1x8x128xf32>
      %230 = arith.addf %229, %226 : vector<1x8x128xf32>
      %c2_i32_108 = arith.constant 2 : i32
      %231 = arith.addi %143, %c2_i32_108 : i32
      %232 = arith.index_cast %231 : i32 to index
      %c0_109 = arith.constant 0 : index
      %c0_110 = arith.constant 0 : index
      %c0_111 = arith.constant 0 : index
      %233 = vector.load %arg7[%232, %c0_109, %c0_110, %c0_111] : memref<128x1x8x128xf32, #tpu.memory_space<vmem>>, vector<1x1x8x128xf32>
      %234 = vector.shape_cast %233 : vector<1x1x8x128xf32> to vector<1x8x128xf32>
      %235 = vector.shape_cast %230 : vector<1x8x128xf32> to vector<1x1x8x128xf32>
      tpu.vector_store %arg7[%232, %c0_109, %c0_110, %c0_111], %235 {strides = array<i32>} : memref<128x1x8x128xf32, #tpu.memory_space<vmem>>, vector<1x1x8x128xf32>,
      %c3_i32 = arith.constant 3 : i32
      %236 = arith.addi %143, %c3_i32 : i32
      %237 = arith.index_cast %236 : i32 to index
      %c0_112 = arith.constant 0 : index
      %c0_113 = arith.constant 0 : index
      %c0_114 = arith.constant 0 : index
      %238 = vector.load %arg2[%237, %c0_112, %c0_113, %c0_114] : memref<128x1x8x128xf32, #tpu.memory_space<vmem>>, vector<1x1x8x128xf32>
      %239 = vector.shape_cast %238 : vector<1x1x8x128xf32> to vector<1x8x128xf32>
      %240 = arith.mulf %arg16, %239 : vector<1x8x128xf32>
      %cst_115 = arith.constant 1.000000e+00 : f32
      %241 = vector.broadcast %cst_115 : f32 to vector<1x8x128xf32>
      %242 = arith.subf %241, %arg16 : vector<1x8x128xf32>
      %243 = arith.mulf %242, %230 : vector<1x8x128xf32>
      %244 = arith.addf %243, %240 : vector<1x8x128xf32>
      %c3_i32_116 = arith.constant 3 : i32
      %245 = arith.addi %143, %c3_i32_116 : i32
      %246 = arith.index_cast %245 : i32 to index
      %c0_117 = arith.constant 0 : index
      %c0_118 = arith.constant 0 : index
      %c0_119 = arith.constant 0 : index
      %247 = vector.load %arg7[%246, %c0_117, %c0_118, %c0_119] : memref<128x1x8x128xf32, #tpu.memory_space<vmem>>, vector<1x1x8x128xf32>
      %248 = vector.shape_cast %247 : vector<1x1x8x128xf32> to vector<1x8x128xf32>
      %249 = vector.shape_cast %244 : vector<1x8x128xf32> to vector<1x1x8x128xf32>
      tpu.vector_store %arg7[%246, %c0_117, %c0_118, %c0_119], %249 {strides = array<i32>} : memref<128x1x8x128xf32, #tpu.memory_space<vmem>>, vector<1x1x8x128xf32>,
      %c4_i32 = arith.constant 4 : i32
      %250 = arith.addi %143, %c4_i32 : i32
      %251 = arith.index_cast %250 : i32 to index
      %c0_120 = arith.constant 0 : index
      %c0_121 = arith.constant 0 : index
      %c0_122 = arith.constant 0 : index
      %252 = vector.load %arg2[%251, %c0_120, %c0_121, %c0_122] : memref<128x1x8x128xf32, #tpu.memory_space<vmem>>, vector<1x1x8x128xf32>
      %253 = vector.shape_cast %252 : vector<1x1x8x128xf32> to vector<1x8x128xf32>
      %254 = arith.mulf %arg17, %253 : vector<1x8x128xf32>
      %cst_123 = arith.constant 1.000000e+00 : f32
      %255 = vector.broadcast %cst_123 : f32 to vector<1x8x128xf32>
      %256 = arith.subf %255, %arg17 : vector<1x8x128xf32>
      %257 = arith.mulf %256, %244 : vector<1x8x128xf32>
      %258 = arith.addf %257, %254 : vector<1x8x128xf32>
      %c4_i32_124 = arith.constant 4 : i32
      %259 = arith.addi %143, %c4_i32_124 : i32
      %260 = arith.index_cast %259 : i32 to index
      %c0_125 = arith.constant 0 : index
      %c0_126 = arith.constant 0 : index
      %c0_127 = arith.constant 0 : index
      %261 = vector.load %arg7[%260, %c0_125, %c0_126, %c0_127] : memref<128x1x8x128xf32, #tpu.memory_space<vmem>>, vector<1x1x8x128xf32>
      %262 = vector.shape_cast %261 : vector<1x1x8x128xf32> to vector<1x8x128xf32>
      %263 = vector.shape_cast %258 : vector<1x8x128xf32> to vector<1x1x8x128xf32>
      tpu.vector_store %arg7[%260, %c0_125, %c0_126, %c0_127], %263 {strides = array<i32>} : memref<128x1x8x128xf32, #tpu.memory_space<vmem>>, vector<1x1x8x128xf32>,
      %c5_i32 = arith.constant 5 : i32
      %264 = arith.addi %143, %c5_i32 : i32
      %265 = arith.index_cast %264 : i32 to index
      %c0_128 = arith.constant 0 : index
      %c0_129 = arith.constant 0 : index
      %c0_130 = arith.constant 0 : index
      %266 = vector.load %arg2[%265, %c0_128, %c0_129, %c0_130] : memref<128x1x8x128xf32, #tpu.memory_space<vmem>>, vector<1x1x8x128xf32>
      %267 = vector.shape_cast %266 : vector<1x1x8x128xf32> to vector<1x8x128xf32>
      %268 = arith.mulf %arg18, %267 : vector<1x8x128xf32>
      %cst_131 = arith.constant 1.000000e+00 : f32
      %269 = vector.broadcast %cst_131 : f32 to vector<1x8x128xf32>
      %270 = arith.subf %269, %arg18 : vector<1x8x128xf32>
      %271 = arith.mulf %270, %258 : vector<1x8x128xf32>
      %272 = arith.addf %271, %268 : vector<1x8x128xf32>
      %c5_i32_132 = arith.constant 5 : i32
      %273 = arith.addi %143, %c5_i32_132 : i32
      %274 = arith.index_cast %273 : i32 to index
      %c0_133 = arith.constant 0 : index
      %c0_134 = arith.constant 0 : index
      %c0_135 = arith.constant 0 : index
      %275 = vector.load %arg7[%274, %c0_133, %c0_134, %c0_135] : memref<128x1x8x128xf32, #tpu.memory_space<vmem>>, vector<1x1x8x128xf32>
      %276 = vector.shape_cast %275 : vector<1x1x8x128xf32> to vector<1x8x128xf32>
      %277 = vector.shape_cast %272 : vector<1x8x128xf32> to vector<1x1x8x128xf32>
      tpu.vector_store %arg7[%274, %c0_133, %c0_134, %c0_135], %277 {strides = array<i32>} : memref<128x1x8x128xf32, #tpu.memory_space<vmem>>, vector<1x1x8x128xf32>,
      %c6_i32 = arith.constant 6 : i32
      %278 = arith.addi %143, %c6_i32 : i32
      %279 = arith.index_cast %278 : i32 to index
      %c0_136 = arith.constant 0 : index
      %c0_137 = arith.constant 0 : index
      %c0_138 = arith.constant 0 : index
      %280 = vector.load %arg2[%279, %c0_136, %c0_137, %c0_138] : memref<128x1x8x128xf32, #tpu.memory_space<vmem>>, vector<1x1x8x128xf32>
      %281 = vector.shape_cast %280 : vector<1x1x8x128xf32> to vector<1x8x128xf32>
      %282 = arith.mulf %arg19, %281 : vector<1x8x128xf32>
      %cst_139 = arith.constant 1.000000e+00 : f32
      %283 = vector.broadcast %cst_139 : f32 to vector<1x8x128xf32>
      %284 = arith.subf %283, %arg19 : vector<1x8x128xf32>
      %285 = arith.mulf %284, %272 : vector<1x8x128xf32>
      %286 = arith.addf %285, %282 : vector<1x8x128xf32>
      %c6_i32_140 = arith.constant 6 : i32
      %287 = arith.addi %143, %c6_i32_140 : i32
      %288 = arith.index_cast %287 : i32 to index
      %c0_141 = arith.constant 0 : index
      %c0_142 = arith.constant 0 : index
      %c0_143 = arith.constant 0 : index
      %289 = vector.load %arg7[%288, %c0_141, %c0_142, %c0_143] : memref<128x1x8x128xf32, #tpu.memory_space<vmem>>, vector<1x1x8x128xf32>
      %290 = vector.shape_cast %289 : vector<1x1x8x128xf32> to vector<1x8x128xf32>
      %291 = vector.shape_cast %286 : vector<1x8x128xf32> to vector<1x1x8x128xf32>
      tpu.vector_store %arg7[%288, %c0_141, %c0_142, %c0_143], %291 {strides = array<i32>} : memref<128x1x8x128xf32, #tpu.memory_space<vmem>>, vector<1x1x8x128xf32>,
      %c7_i32 = arith.constant 7 : i32
      %292 = arith.addi %143, %c7_i32 : i32
      %293 = arith.index_cast %292 : i32 to index
      %c0_144 = arith.constant 0 : index
      %c0_145 = arith.constant 0 : index
      %c0_146 = arith.constant 0 : index
      %294 = vector.load %arg2[%293, %c0_144, %c0_145, %c0_146] : memref<128x1x8x128xf32, #tpu.memory_space<vmem>>, vector<1x1x8x128xf32>
      %295 = vector.shape_cast %294 : vector<1x1x8x128xf32> to vector<1x8x128xf32>
      %296 = arith.mulf %arg20, %295 : vector<1x8x128xf32>
      %cst_147 = arith.constant 1.000000e+00 : f32
      %297 = vector.broadcast %cst_147 : f32 to vector<1x8x128xf32>
      %298 = arith.subf %297, %arg20 : vector<1x8x128xf32>
      %299 = arith.mulf %298, %286 : vector<1x8x128xf32>
      %300 = arith.addf %299, %296 : vector<1x8x128xf32>
      %c7_i32_148 = arith.constant 7 : i32
      %301 = arith.addi %143, %c7_i32_148 : i32
      %302 = arith.index_cast %301 : i32 to index
      %c0_149 = arith.constant 0 : index
      %c0_150 = arith.constant 0 : index
      %c0_151 = arith.constant 0 : index
      %303 = vector.load %arg7[%302, %c0_149, %c0_150, %c0_151] : memref<128x1x8x128xf32, #tpu.memory_space<vmem>>, vector<1x1x8x128xf32>
      %304 = vector.shape_cast %303 : vector<1x1x8x128xf32> to vector<1x8x128xf32>
      %305 = vector.shape_cast %300 : vector<1x8x128xf32> to vector<1x1x8x128xf32>
      tpu.vector_store %arg7[%302, %c0_149, %c0_150, %c0_151], %305 {strides = array<i32>} : memref<128x1x8x128xf32, #tpu.memory_space<vmem>>, vector<1x1x8x128xf32>,
      scf.yield %300, %193, %150, %156, %162, %168, %174, %180, %186, %192 : vector<1x8x128xf32>, vector<1x8x128xf32>, vector<1x8x128xf32>, vector<1x8x128xf32>, vector<1x8x128xf32>, vector<1x8x128xf32>, vector<1x8x128xf32>, vector<1x8x128xf32>, vector<1x8x128xf32>, vector<1x8x128xf32>
    }
    %c15_i32_13 = arith.constant 15 : i32
    %c120 = arith.constant 120 : index
    %c0_14 = arith.constant 0 : index
    %c0_15 = arith.constant 0 : index
    %c0_16 = arith.constant 0 : index
    %59 = vector.load %arg2[%c120, %c0_14, %c0_15, %c0_16] : memref<128x1x8x128xf32, #tpu.memory_space<vmem>>, vector<1x1x8x128xf32>
    %60 = vector.shape_cast %59 : vector<1x1x8x128xf32> to vector<1x8x128xf32>
    %61 = arith.mulf %58#2, %60 : vector<1x8x128xf32>
    %cst_17 = arith.constant 1.000000e+00 : f32
    %62 = vector.broadcast %cst_17 : f32 to vector<1x8x128xf32>
    %63 = arith.subf %62, %58#2 : vector<1x8x128xf32>
    %64 = arith.mulf %63, %58#0 : vector<1x8x128xf32>
    %65 = arith.addf %64, %61 : vector<1x8x128xf32>
    %c120_18 = arith.constant 120 : index
    %c0_19 = arith.constant 0 : index
    %c0_20 = arith.constant 0 : index
    %c0_21 = arith.constant 0 : index
    %66 = vector.load %arg7[%c120_18, %c0_19, %c0_20, %c0_21] : memref<128x1x8x128xf32, #tpu.memory_space<vmem>>, vector<1x1x8x128xf32>
    %67 = vector.shape_cast %66 : vector<1x1x8x128xf32> to vector<1x8x128xf32>
    %68 = vector.shape_cast %65 : vector<1x8x128xf32> to vector<1x1x8x128xf32>
    tpu.vector_store %arg7[%c120_18, %c0_19, %c0_20, %c0_21], %68 {strides = array<i32>} : memref<128x1x8x128xf32, #tpu.memory_space<vmem>>, vector<1x1x8x128xf32>,
    %c121 = arith.constant 121 : index
    %c0_22 = arith.constant 0 : index
    %c0_23 = arith.constant 0 : index
    %c0_24 = arith.constant 0 : index
    %69 = vector.load %arg2[%c121, %c0_22, %c0_23, %c0_24] : memref<128x1x8x128xf32, #tpu.memory_space<vmem>>, vector<1x1x8x128xf32>
    %70 = vector.shape_cast %69 : vector<1x1x8x128xf32> to vector<1x8x128xf32>
    %71 = arith.mulf %58#3, %70 : vector<1x8x128xf32>
    %cst_25 = arith.constant 1.000000e+00 : f32
    %72 = vector.broadcast %cst_25 : f32 to vector<1x8x128xf32>
    %73 = arith.subf %72, %58#3 : vector<1x8x128xf32>
    %74 = arith.mulf %73, %65 : vector<1x8x128xf32>
    %75 = arith.addf %74, %71 : vector<1x8x128xf32>
    %c121_26 = arith.constant 121 : index
    %c0_27 = arith.constant 0 : index
    %c0_28 = arith.constant 0 : index
    %c0_29 = arith.constant 0 : index
    %76 = vector.load %arg7[%c121_26, %c0_27, %c0_28, %c0_29] : memref<128x1x8x128xf32, #tpu.memory_space<vmem>>, vector<1x1x8x128xf32>
    %77 = vector.shape_cast %76 : vector<1x1x8x128xf32> to vector<1x8x128xf32>
    %78 = vector.shape_cast %75 : vector<1x8x128xf32> to vector<1x1x8x128xf32>
    tpu.vector_store %arg7[%c121_26, %c0_27, %c0_28, %c0_29], %78 {strides = array<i32>} : memref<128x1x8x128xf32, #tpu.memory_space<vmem>>, vector<1x1x8x128xf32>,
    %c122 = arith.constant 122 : index
    %c0_30 = arith.constant 0 : index
    %c0_31 = arith.constant 0 : index
    %c0_32 = arith.constant 0 : index
    %79 = vector.load %arg2[%c122, %c0_30, %c0_31, %c0_32] : memref<128x1x8x128xf32, #tpu.memory_space<vmem>>, vector<1x1x8x128xf32>
    %80 = vector.shape_cast %79 : vector<1x1x8x128xf32> to vector<1x8x128xf32>
    %81 = arith.mulf %58#4, %80 : vector<1x8x128xf32>
    %cst_33 = arith.constant 1.000000e+00 : f32
    %82 = vector.broadcast %cst_33 : f32 to vector<1x8x128xf32>
    %83 = arith.subf %82, %58#4 : vector<1x8x128xf32>
    %84 = arith.mulf %83, %75 : vector<1x8x128xf32>
    %85 = arith.addf %84, %81 : vector<1x8x128xf32>
    %c122_34 = arith.constant 122 : index
    %c0_35 = arith.constant 0 : index
    %c0_36 = arith.constant 0 : index
    %c0_37 = arith.constant 0 : index
    %86 = vector.load %arg7[%c122_34, %c0_35, %c0_36, %c0_37] : memref<128x1x8x128xf32, #tpu.memory_space<vmem>>, vector<1x1x8x128xf32>
    %87 = vector.shape_cast %86 : vector<1x1x8x128xf32> to vector<1x8x128xf32>
    %88 = vector.shape_cast %85 : vector<1x8x128xf32> to vector<1x1x8x128xf32>
    tpu.vector_store %arg7[%c122_34, %c0_35, %c0_36, %c0_37], %88 {strides = array<i32>} : memref<128x1x8x128xf32, #tpu.memory_space<vmem>>, vector<1x1x8x128xf32>,
    %c123 = arith.constant 123 : index
    %c0_38 = arith.constant 0 : index
    %c0_39 = arith.constant 0 : index
    %c0_40 = arith.constant 0 : index
    %89 = vector.load %arg2[%c123, %c0_38, %c0_39, %c0_40] : memref<128x1x8x128xf32, #tpu.memory_space<vmem>>, vector<1x1x8x128xf32>
    %90 = vector.shape_cast %89 : vector<1x1x8x128xf32> to vector<1x8x128xf32>
    %91 = arith.mulf %58#5, %90 : vector<1x8x128xf32>
    %cst_41 = arith.constant 1.000000e+00 : f32
    %92 = vector.broadcast %cst_41 : f32 to vector<1x8x128xf32>
    %93 = arith.subf %92, %58#5 : vector<1x8x128xf32>
    %94 = arith.mulf %93, %85 : vector<1x8x128xf32>
    %95 = arith.addf %94, %91 : vector<1x8x128xf32>
    %c123_42 = arith.constant 123 : index
    %c0_43 = arith.constant 0 : index
    %c0_44 = arith.constant 0 : index
    %c0_45 = arith.constant 0 : index
    %96 = vector.load %arg7[%c123_42, %c0_43, %c0_44, %c0_45] : memref<128x1x8x128xf32, #tpu.memory_space<vmem>>, vector<1x1x8x128xf32>
    %97 = vector.shape_cast %96 : vector<1x1x8x128xf32> to vector<1x8x128xf32>
    %98 = vector.shape_cast %95 : vector<1x8x128xf32> to vector<1x1x8x128xf32>
    tpu.vector_store %arg7[%c123_42, %c0_43, %c0_44, %c0_45], %98 {strides = array<i32>} : memref<128x1x8x128xf32, #tpu.memory_space<vmem>>, vector<1x1x8x128xf32>,
    %c124 = arith.constant 124 : index
    %c0_46 = arith.constant 0 : index
    %c0_47 = arith.constant 0 : index
    %c0_48 = arith.constant 0 : index
    %99 = vector.load %arg2[%c124, %c0_46, %c0_47, %c0_48] : memref<128x1x8x128xf32, #tpu.memory_space<vmem>>, vector<1x1x8x128xf32>
    %100 = vector.shape_cast %99 : vector<1x1x8x128xf32> to vector<1x8x128xf32>
    %101 = arith.mulf %58#6, %100 : vector<1x8x128xf32>
    %cst_49 = arith.constant 1.000000e+00 : f32
    %102 = vector.broadcast %cst_49 : f32 to vector<1x8x128xf32>
    %103 = arith.subf %102, %58#6 : vector<1x8x128xf32>
    %104 = arith.mulf %103, %95 : vector<1x8x128xf32>
    %105 = arith.addf %104, %101 : vector<1x8x128xf32>
    %c124_50 = arith.constant 124 : index
    %c0_51 = arith.constant 0 : index
    %c0_52 = arith.constant 0 : index
    %c0_53 = arith.constant 0 : index
    %106 = vector.load %arg7[%c124_50, %c0_51, %c0_52, %c0_53] : memref<128x1x8x128xf32, #tpu.memory_space<vmem>>, vector<1x1x8x128xf32>
    %107 = vector.shape_cast %106 : vector<1x1x8x128xf32> to vector<1x8x128xf32>
    %108 = vector.shape_cast %105 : vector<1x8x128xf32> to vector<1x1x8x128xf32>
    tpu.vector_store %arg7[%c124_50, %c0_51, %c0_52, %c0_53], %108 {strides = array<i32>} : memref<128x1x8x128xf32, #tpu.memory_space<vmem>>, vector<1x1x8x128xf32>,
    %c125 = arith.constant 125 : index
    %c0_54 = arith.constant 0 : index
    %c0_55 = arith.constant 0 : index
    %c0_56 = arith.constant 0 : index
    %109 = vector.load %arg2[%c125, %c0_54, %c0_55, %c0_56] : memref<128x1x8x128xf32, #tpu.memory_space<vmem>>, vector<1x1x8x128xf32>
    %110 = vector.shape_cast %109 : vector<1x1x8x128xf32> to vector<1x8x128xf32>
    %111 = arith.mulf %58#7, %110 : vector<1x8x128xf32>
    %cst_57 = arith.constant 1.000000e+00 : f32
    %112 = vector.broadcast %cst_57 : f32 to vector<1x8x128xf32>
    %113 = arith.subf %112, %58#7 : vector<1x8x128xf32>
    %114 = arith.mulf %113, %105 : vector<1x8x128xf32>
    %115 = arith.addf %114, %111 : vector<1x8x128xf32>
    %c125_58 = arith.constant 125 : index
    %c0_59 = arith.constant 0 : index
    %c0_60 = arith.constant 0 : index
    %c0_61 = arith.constant 0 : index
    %116 = vector.load %arg7[%c125_58, %c0_59, %c0_60, %c0_61] : memref<128x1x8x128xf32, #tpu.memory_space<vmem>>, vector<1x1x8x128xf32>
    %117 = vector.shape_cast %116 : vector<1x1x8x128xf32> to vector<1x8x128xf32>
    %118 = vector.shape_cast %115 : vector<1x8x128xf32> to vector<1x1x8x128xf32>
    tpu.vector_store %arg7[%c125_58, %c0_59, %c0_60, %c0_61], %118 {strides = array<i32>} : memref<128x1x8x128xf32, #tpu.memory_space<vmem>>, vector<1x1x8x128xf32>,
    %c126 = arith.constant 126 : index
    %c0_62 = arith.constant 0 : index
    %c0_63 = arith.constant 0 : index
    %c0_64 = arith.constant 0 : index
    %119 = vector.load %arg2[%c126, %c0_62, %c0_63, %c0_64] : memref<128x1x8x128xf32, #tpu.memory_space<vmem>>, vector<1x1x8x128xf32>
    %120 = vector.shape_cast %119 : vector<1x1x8x128xf32> to vector<1x8x128xf32>
    %121 = arith.mulf %58#8, %120 : vector<1x8x128xf32>
    %cst_65 = arith.constant 1.000000e+00 : f32
    %122 = vector.broadcast %cst_65 : f32 to vector<1x8x128xf32>
    %123 = arith.subf %122, %58#8 : vector<1x8x128xf32>
    %124 = arith.mulf %123, %115 : vector<1x8x128xf32>
    %125 = arith.addf %124, %121 : vector<1x8x128xf32>
    %c126_66 = arith.constant 126 : index
    %c0_67 = arith.constant 0 : index
    %c0_68 = arith.constant 0 : index
    %c0_69 = arith.constant 0 : index
    %126 = vector.load %arg7[%c126_66, %c0_67, %c0_68, %c0_69] : memref<128x1x8x128xf32, #tpu.memory_space<vmem>>, vector<1x1x8x128xf32>
    %127 = vector.shape_cast %126 : vector<1x1x8x128xf32> to vector<1x8x128xf32>
    %128 = vector.shape_cast %125 : vector<1x8x128xf32> to vector<1x1x8x128xf32>
    tpu.vector_store %arg7[%c126_66, %c0_67, %c0_68, %c0_69], %128 {strides = array<i32>} : memref<128x1x8x128xf32, #tpu.memory_space<vmem>>, vector<1x1x8x128xf32>,
    %c127 = arith.constant 127 : index
    %c0_70 = arith.constant 0 : index
    %c0_71 = arith.constant 0 : index
    %c0_72 = arith.constant 0 : index
    %129 = vector.load %arg2[%c127, %c0_70, %c0_71, %c0_72] : memref<128x1x8x128xf32, #tpu.memory_space<vmem>>, vector<1x1x8x128xf32>
    %130 = vector.shape_cast %129 : vector<1x1x8x128xf32> to vector<1x8x128xf32>
    %131 = arith.mulf %58#9, %130 : vector<1x8x128xf32>
    %cst_73 = arith.constant 1.000000e+00 : f32
    %132 = vector.broadcast %cst_73 : f32 to vector<1x8x128xf32>
    %133 = arith.subf %132, %58#9 : vector<1x8x128xf32>
    %134 = arith.mulf %133, %125 : vector<1x8x128xf32>
    %135 = arith.addf %134, %131 : vector<1x8x128xf32>
    %c127_74 = arith.constant 127 : index
    %c0_75 = arith.constant 0 : index
    %c0_76 = arith.constant 0 : index
    %c0_77 = arith.constant 0 : index
    %136 = vector.load %arg7[%c127_74, %c0_75, %c0_76, %c0_77] : memref<128x1x8x128xf32, #tpu.memory_space<vmem>>, vector<1x1x8x128xf32>
    %137 = vector.shape_cast %136 : vector<1x1x8x128xf32> to vector<1x8x128xf32>
    %138 = vector.shape_cast %135 : vector<1x8x128xf32> to vector<1x1x8x128xf32>
    tpu.vector_store %arg7[%c127_74, %c0_75, %c0_76, %c0_77], %138 {strides = array<i32>} : memref<128x1x8x128xf32, #tpu.memory_space<vmem>>, vector<1x1x8x128xf32>,
    %c0_78 = arith.constant 0 : index
    %c0_79 = arith.constant 0 : index
    %c0_80 = arith.constant 0 : index
    %139 = vector.load %arg8[%c0_78, %c0_79, %c0_80] : memref<1x8x128xf32, #tpu.memory_space<vmem>>, vector<1x8x128xf32>
    tpu.vector_store %arg8[%c0_78, %c0_79, %c0_80], %135 {strides = array<i32>} : memref<1x8x128xf32, #tpu.memory_space<vmem>>, vector<1x8x128xf32>,
    %c0_81 = arith.constant 0 : index
    %c0_82 = arith.constant 0 : index
    %c0_83 = arith.constant 0 : index
    %140 = vector.load %arg9[%c0_81, %c0_82, %c0_83] : memref<1x8x128xf32, #tpu.memory_space<vmem>>, vector<1x8x128xf32>
    tpu.vector_store %arg9[%c0_81, %c0_82, %c0_83], %58#1 {strides = array<i32>} : memref<1x8x128xf32, #tpu.memory_space<vmem>>, vector<1x8x128xf32>,
    return
  }
  func.func @transform_0(%arg0: i32, %arg1: i32) -> (i32, i32, i32, i32) {
    %c0_i32 = arith.constant 0 : i32
    %c0_i32_0 = arith.constant 0 : i32
    %c0_i32_1 = arith.constant 0 : i32
    return %arg1, %arg0, %c0_i32, %c0_i32_0 : i32, i32, i32, i32
  }
  func.func @transform_1(%arg0: i32, %arg1: i32) -> (i32, i32, i32) {
    %c0_i32 = arith.constant 0 : i32
    %c0_i32_0 = arith.constant 0 : i32
    %c0_i32_1 = arith.constant 0 : i32
    return %arg0, %c0_i32, %c0_i32_0 : i32, i32, i32
  }
  func.func @transform_2(%arg0: i32, %arg1: i32) -> (i32, i32, i32) {
    %c0_i32 = arith.constant 0 : i32
    %c0_i32_0 = arith.constant 0 : i32
    %c0_i32_1 = arith.constant 0 : i32
    return %arg0, %c0_i32, %c0_i32_0 : i32, i32, i32
  }
  func.func @transform_3(%arg0: i32, %arg1: i32) -> (i32, i32, i32) {
    %c0_i32 = arith.constant 0 : i32
    %c0_i32_0 = arith.constant 0 : i32
    %c0_i32_1 = arith.constant 0 : i32
    return %arg0, %c0_i32, %c0_i32_0 : i32, i32, i32
  }
  func.func @transform_4(%arg0: i32, %arg1: i32) -> (i32, i32, i32) {
    %c0_i32 = arith.constant 0 : i32
    %c0_i32_0 = arith.constant 0 : i32
    %c0_i32_1 = arith.constant 0 : i32
    return %arg0, %c0_i32, %c0_i32_0 : i32, i32, i32
  }
  func.func @transform_5(%arg0: i32, %arg1: i32) -> (i32, i32, i32, i32) {
    %c0_i32 = arith.constant 0 : i32
    %c0_i32_0 = arith.constant 0 : i32
    %c0_i32_1 = arith.constant 0 : i32
    return %arg1, %arg0, %c0_i32, %c0_i32_0 : i32, i32, i32, i32
  }
}

</mosaic_0001>

<llo_original>
// kernel: tpu_custom_call.1
$region0: #{tpu_custom_call.1}
  #allocation0 [shape = 'u32[]', space=smem, size = 0x4, offset = 0x4, fixed_abs, tag = 'smem constant byte address 0x4 - core index']
  #allocation1 [shape = 'u32[144,128]{1,0:T(1,128)}', space=vmem, size = 0x12000, scoped, tag = 'internal scratch']
  #allocation2 [shape = 'f32[1,8,128]{2,1,0:T(8,128)}', space=vmem, size = 0x1000, scoped, tag = 'scratch operand']
  #allocation3 [shape = 'f32[1,8,128]{2,1,0:T(8,128)}', space=vmem, size = 0x1000, scoped, tag = 'scratch operand']
  %s0 = inlined_call_operand.hbm [shape: f32[128,1,8,128], index: 0, kind: input, shape index: {}, may-alias: {0,5}]
  %s1 = inlined_call_operand.vmem [shape: f32[1,8,128], index: 1, kind: input, shape index: {}]
  %s2 = inlined_call_operand.vmem [shape: f32[1,8,128], index: 2, kind: input, shape index: {}]
  %s3 = inlined_call_operand.vmem [shape: f32[1,8,128], index: 3, kind: input, shape index: {}]
  %s4 = inlined_call_operand.vmem [shape: f32[1,8,128], index: 4, kind: input, shape index: {}]
  %s5 = inlined_call_operand.hbm [shape: f32[128,1,8,128], index: 5, kind: output, shape index: {}, may-alias: {0,5}]
  %s6 = sld [smem:[#allocation0]]
  $region45: #{tpu_custom_call.1} parent=0
    _
  %s8 = ssub.s32 1, %s6
  %s9 = scalar_select 0, %s8, %s6
  $region1: #{tpu_custom_call.1} parent=0
    #allocation4 [shape = 'u8[524288]{0}', space=vmem, size = 0x80000, scoped, tag = 'input window, operand 0, single buffered']
    #allocation5 [shape = 's32[1]{0}', space=sflag, size = 0x4, scoped, tag = 'scoped memory for tpu_custom_call.1']
    #allocation6 [shape = 's32[1]{0}', space=sflag, size = 0x4, scoped, tag = 'scoped memory for tpu_custom_call.1']
    #allocation7 [shape = 'u8[524288]{0}', space=vmem, size = 0x80000, scoped, tag = 'output window, operand 0, single buffered']
    %10 = vsyncpa [#allocation5], 0
    %11 = vsyncpa [#allocation6], 0
    // Predicated region
    $region2: #{tpu_custom_call.1} parent=1 // pred_check
      _
    $region3: #{tpu_custom_call.1} parent=1 // pred_check_branch
      %13 = sbr.rel (0) target = $region5
    $region4: #{tpu_custom_call.1} parent=1 // pred_region
      %s15 = ssub.s32 16384, 16384
      %16 = vsyncadd [#allocation5], %s15
      %s17 = sshll.u32 [#allocation4], 4
      %s18 = int_to_ptr.vmem [resolvable:$true] %s17
      %23 = dma.hbm_to_vmem [thread:$0]  %s0, 16384, %s18, [#allocation5], 128, 128, 8
    $region5: #{tpu_custom_call.1} parent=1 // pred_fallthru
      _
    // Predicated region
    $region6: #{tpu_custom_call.1} parent=1 // pred_check
      _
    $region7: #{tpu_custom_call.1} parent=1 // pred_check_branch
      %25 = sbr.rel (0) target = $region9
    $region8: #{tpu_custom_call.1} parent=1 // pred_region
      _
    $region9: #{tpu_custom_call.1} parent=1 // pred_fallthru
      _
    // Predicated region
    $region10: #{tpu_custom_call.1} parent=1 // pred_check
      _
    $region11: #{tpu_custom_call.1} parent=1 // pred_check_branch
      %27 = sbr.rel (0) target = $region13
    $region12: #{tpu_custom_call.1} parent=1 // pred_region
      _
    $region13: #{tpu_custom_call.1} parent=1 // pred_fallthru
      _
    // Predicated region
    $region14: #{tpu_custom_call.1} parent=1 // pred_check
      _
    $region15: #{tpu_custom_call.1} parent=1 // pred_check_branch
      %29 = sbr.rel (0) target = $region17
    $region16: #{tpu_custom_call.1} parent=1 // pred_region
      _
    $region17: #{tpu_custom_call.1} parent=1 // pred_fallthru
      _
    // Predicated region
    $region18: #{tpu_custom_call.1} parent=1 // pred_check
      _
    $region19: #{tpu_custom_call.1} parent=1 // pred_check_branch
      %31 = sbr.rel (0) target = $region21
    $region20: #{tpu_custom_call.1} parent=1 // pred_region
      _
    $region21: #{tpu_custom_call.1} parent=1 // pred_fallthru
      _
    // Predicated region
    $region22: #{tpu_custom_call.1} parent=1 // pred_check
      _
    $region23: #{tpu_custom_call.1} parent=1 // pred_check_branch
      %33 = sbr.rel (0) target = $region25
    $region24: #{tpu_custom_call.1} parent=1 // pred_region
      %34 = dma.done [#allocation5], 16384
    $region25: #{tpu_custom_call.1} parent=1 // pred_fallthru
      _
    %p35 = scmp.eq.s32.totalorder 0, 0
    // Predicated region
    $region26: #{tpu_custom_call.1} parent=1 // pred_check
      %p36 = pneg %p35
    $region27: #{tpu_custom_call.1} parent=1 // pred_check_branch
      %38 = sbr.rel (%p36) target = $region29
    $region28: #{tpu_custom_call.1} parent=1 // pred_region
      %v39 = vld [vmem:[%s1] sm:$0xff]
      %40 = vst [vmem:[#allocation2] sm:$0xff] %v39
      %v41 = vld [vmem:[%s4] sm:$0xff]
      %42 = vst [vmem:[#allocation3] sm:$0xff] %v41
    $region29: #{tpu_custom_call.1} parent=1 // pred_fallthru
      _
    %v43 = vld [vmem:[%s2] sm:$0xff]
    %v44 = vld [vmem:[%s3] sm:$0xff]
    %v45 = vld [vmem:[#allocation3] sm:$0xff]
    %v46 = vadd.f32 %v45, %v44
    %v47 = vadd.f32 %v46, %v43
    %v48 = vmul.f32 %v43, %v46
    %v49 = vrcp.pop %v47
    %v50 = vmul.f32 %v46, %v49
    %v51 = vmul.f32 %v44, %v47
    %v52 = vadd.f32 %v48, %v51
    %v53 = vmul.f32 %v43, %v47
    %v54 = vadd.f32 %v52, %v53
    %v55 = vmul.f32 %v43, %v52
    %v56 = vrcp.pop %v54
    %v57 = vmul.f32 %v52, %v56
    %v58 = vmul.f32 %v44, %v54
    %v59 = vadd.f32 %v55, %v58
    %v60 = vmul.f32 %v43, %v54
    %v61 = vadd.f32 %v59, %v60
    %v62 = vmul.f32 %v43, %v59
    %v63 = vrcp.pop %v61
    %v64 = vmul.f32 %v59, %v63
    %v65 = vmul.f32 %v44, %v61
    %v66 = vadd.f32 %v62, %v65
    %v67 = vmul.f32 %v43, %v61
    %v68 = vadd.f32 %v66, %v67
    %v69 = vmul.f32 %v43, %v66
    %v70 = vrcp.pop %v68
    %v71 = vmul.f32 %v66, %v70
    %v72 = vmul.f32 %v44, %v68
    %v73 = vadd.f32 %v69, %v72
    %v74 = vmul.f32 %v43, %v68
    %v75 = vadd.f32 %v73, %v74
    %v76 = vmul.f32 %v43, %v73
    %v77 = vrcp.pop %v75
    %v78 = vmul.f32 %v73, %v77
    %v79 = vmul.f32 %v44, %v75
    %v80 = vadd.f32 %v76, %v79
    %v81 = vmul.f32 %v43, %v75
    %v82 = vadd.f32 %v80, %v81
    %v83 = vmul.f32 %v43, %v80
    %v84 = vrcp.pop %v82
    %v85 = vmul.f32 %v80, %v84
    %v86 = vmul.f32 %v44, %v82
    %v87 = vadd.f32 %v83, %v86
    %v88 = vmul.f32 %v43, %v82
    %v89 = vadd.f32 %v87, %v88
    %v90 = vmul.f32 %v43, %v87
    %v91 = vrcp.pop %v89
    %v92 = vmul.f32 %v87, %v91
    %v93 = vmul.f32 %v44, %v89
    %v94 = vadd.f32 %v90, %v93
    %v95 = vmul.f32 %v43, %v89
    %v96 = vadd.f32 %v94, %v95
    %v97 = vmul.f32 %v43, %v94
    %v98 = vrcp.pop %v96
    %v99 = vmul.f32 %v94, %v98
    %v100 = vmul.f32 %v97, %v98
    %v101 = vld [vmem:[#allocation2] sm:$0xff]
    loop: start=1, step=1, limit=16
    $region30: #{tpu_custom_call.1} parent=1 // loop_pre_header
      _
    $region31: #{tpu_custom_call.1} parent=1 // loop_header
      %s103 = sphi 1, %s107
      %p104 = scmp.ge.s32.totalorder %s103, 16
      %v108 = vphi %v101, %v251
      %v109 = vphi %v100, %v174
      %v110 = vphi %v50, %v124
      %v111 = vphi %v57, %v131
      %v112 = vphi %v64, %v138
      %v113 = vphi %v71, %v145
      %v114 = vphi %v78, %v152
      %v115 = vphi %v85, %v159
      %v116 = vphi %v92, %v166
      %v117 = vphi %v99, %v173
    $region32: #{tpu_custom_call.1} parent=1 // loop_header_branch
      %106 = sbr.rel (%p104) target = $region36
    $region33: #{tpu_custom_call.1} parent=1 // loop_body
      %s118 = ssub.s32 %s103, 1
      %s119 = smul.u32 %s118, 8
      %v120 = vadd.f32 %v109, %v44
      %v121 = vadd.f32 %v120, %v43
      %v122 = vmul.f32 %v43, %v120
      %v123 = vrcp.pop %v121
      %v124 = vmul.f32 %v120, %v123
      %v125 = vmul.f32 %v44, %v121
      %v126 = vadd.f32 %v122, %v125
      %v127 = vmul.f32 %v43, %v121
      %v128 = vadd.f32 %v126, %v127
      %v129 = vmul.f32 %v43, %v126
      %v130 = vrcp.pop %v128
      %v131 = vmul.f32 %v126, %v130
      %v132 = vmul.f32 %v44, %v128
      %v133 = vadd.f32 %v129, %v132
      %v134 = vmul.f32 %v43, %v128
      %v135 = vadd.f32 %v133, %v134
      %v136 = vmul.f32 %v43, %v133
      %v137 = vrcp.pop %v135
      %v138 = vmul.f32 %v133, %v137
      %v139 = vmul.f32 %v44, %v135
      %v140 = vadd.f32 %v136, %v139
      %v141 = vmul.f32 %v43, %v135
      %v142 = vadd.f32 %v140, %v141
      %v143 = vmul.f32 %v43, %v140
      %v144 = vrcp.pop %v142
      %v145 = vmul.f32 %v140, %v144
      %v146 = vmul.f32 %v44, %v142
      %v147 = vadd.f32 %v143, %v146
      %v148 = vmul.f32 %v43, %v142
      %v149 = vadd.f32 %v147, %v148
      %v150 = vmul.f32 %v43, %v147
      %v151 = vrcp.pop %v149
      %v152 = vmul.f32 %v147, %v151
      %v153 = vmul.f32 %v44, %v149
      %v154 = vadd.f32 %v150, %v153
      %v155 = vmul.f32 %v43, %v149
      %v156 = vadd.f32 %v154, %v155
      %v157 = vmul.f32 %v43, %v154
      %v158 = vrcp.pop %v156
      %v159 = vmul.f32 %v154, %v158
      %v160 = vmul.f32 %v44, %v156
      %v161 = vadd.f32 %v157, %v160
      %v162 = vmul.f32 %v43, %v156
      %v163 = vadd.f32 %v161, %v162
      %v164 = vmul.f32 %v43, %v161
      %v165 = vrcp.pop %v163
      %v166 = vmul.f32 %v161, %v165
      %v167 = vmul.f32 %v44, %v163
      %v168 = vadd.f32 %v164, %v167
      %v169 = vmul.f32 %v43, %v163
      %v170 = vadd.f32 %v168, %v169
      %v171 = vmul.f32 %v43, %v168
      %v172 = vrcp.pop %v170
      %v173 = vmul.f32 %v168, %v172
      %v174 = vmul.f32 %v171, %v172
      %s175 = smul.u32 %s119, 8
      %s176 = scalar_lea.vmem [#allocation4], %s175
      %v177 = vld [vmem:[%s176] sm:$0xff]
      %v178 = vmul.f32 %v110, %v177
      %v179 = vsub.f32 1.0, %v110
      %v180 = vmul.f32 %v179, %v108
      %v181 = vadd.f32 %v180, %v178
      %s182 = scalar_lea.vmem [#allocation7], %s175
      %183 = vst [vmem:[%s182] sm:$0xff] %v181
      %s184 = sadd.s32 %s119, 1
      %s185 = smul.u32 %s184, 8
      %s186 = scalar_lea.vmem [#allocation4], %s185
      %v187 = vld [vmem:[%s186] sm:$0xff]
      %v188 = vmul.f32 %v111, %v187
      %v189 = vsub.f32 1.0, %v111
      %v190 = vmul.f32 %v189, %v181
      %v191 = vadd.f32 %v190, %v188
      %s192 = scalar_lea.vmem [#allocation7], %s185
      %193 = vst [vmem:[%s192] sm:$0xff] %v191
      %s194 = sadd.s32 %s119, 2
      %s195 = smul.u32 %s194, 8
      %s196 = scalar_lea.vmem [#allocation4], %s195
      %v197 = vld [vmem:[%s196] sm:$0xff]
      %v198 = vmul.f32 %v112, %v197
      %v199 = vsub.f32 1.0, %v112
      %v200 = vmul.f32 %v199, %v191
      %v201 = vadd.f32 %v200, %v198
      %s202 = scalar_lea.vmem [#allocation7], %s195
      %203 = vst [vmem:[%s202] sm:$0xff] %v201
      %s204 = sadd.s32 %s119, 3
      %s205 = smul.u32 %s204, 8
      %s206 = scalar_lea.vmem [#allocation4], %s205
      %v207 = vld [vmem:[%s206] sm:$0xff]
      %v208 = vmul.f32 %v113, %v207
      %v209 = vsub.f32 1.0, %v113
      %v210 = vmul.f32 %v209, %v201
      %v211 = vadd.f32 %v210, %v208
      %s212 = scalar_lea.vmem [#allocation7], %s205
      %213 = vst [vmem:[%s212] sm:$0xff] %v211
      %s214 = sadd.s32 %s119, 4
      %s215 = smul.u32 %s214, 8
      %s216 = scalar_lea.vmem [#allocation4], %s215
      %v217 = vld [vmem:[%s216] sm:$0xff]
      %v218 = vmul.f32 %v114, %v217
      %v219 = vsub.f32 1.0, %v114
      %v220 = vmul.f32 %v219, %v211
      %v221 = vadd.f32 %v220, %v218
      %s222 = scalar_lea.vmem [#allocation7], %s215
      %223 = vst [vmem:[%s222] sm:$0xff] %v221
      %s224 = sadd.s32 %s119, 5
      %s225 = smul.u32 %s224, 8
      %s226 = scalar_lea.vmem [#allocation4], %s225
      %v227 = vld [vmem:[%s226] sm:$0xff]
      %v228 = vmul.f32 %v115, %v227
      %v229 = vsub.f32 1.0, %v115
      %v230 = vmul.f32 %v229, %v221
      %v231 = vadd.f32 %v230, %v228
      %s232 = scalar_lea.vmem [#allocation7], %s225
      %233 = vst [vmem:[%s232] sm:$0xff] %v231
      %s234 = sadd.s32 %s119, 6
      %s235 = smul.u32 %s234, 8
      %s236 = scalar_lea.vmem [#allocation4], %s235
      %v237 = vld [vmem:[%s236] sm:$0xff]
      %v238 = vmul.f32 %v116, %v237
      %v239 = vsub.f32 1.0, %v116
      %v240 = vmul.f32 %v239, %v231
      %v241 = vadd.f32 %v240, %v238
      %s242 = scalar_lea.vmem [#allocation7], %s235
      %243 = vst [vmem:[%s242] sm:$0xff] %v241
      %s244 = sadd.s32 %s119, 7
      %s245 = smul.u32 %s244, 8
      %s246 = scalar_lea.vmem [#allocation4], %s245
      %v247 = vld [vmem:[%s246] sm:$0xff]
      %v248 = vmul.f32 %v117, %v247
      %v249 = vsub.f32 1.0, %v117
      %v250 = vmul.f32 %v249, %v241
      %v251 = vadd.f32 %v250, %v248
      %s252 = scalar_lea.vmem [#allocation7], %s245
      %253 = vst [vmem:[%s252] sm:$0xff] %v251
    $region34: #{tpu_custom_call.1} parent=1 // loop_footer
      %s107 = sadd.s32 1, %s103
    $region35: #{tpu_custom_call.1} parent=1 // loop_footer_branch
      %102 = sbr.rel target = $region31
    $region36: #{tpu_custom_call.1} parent=1 // loop_exit
      _
    %s254 = scalar_lea.vmem [#allocation4], 960
    %v255 = vld [vmem:[%s254] sm:$0xff]
    %v256 = vmul.f32 %v110, %v255
    %v257 = vsub.f32 1.0, %v110
    %v258 = vmul.f32 %v257, %v108
    %v259 = vadd.f32 %v258, %v256
    %s260 = scalar_lea.vmem [#allocation7], 960
    %261 = vst [vmem:[%s260] sm:$0xff] %v259
    %s262 = scalar_lea.vmem [#allocation4], 968
    %v263 = vld [vmem:[%s262] sm:$0xff]
    %v264 = vmul.f32 %v111, %v263
    %v265 = vsub.f32 1.0, %v111
    %v266 = vmul.f32 %v265, %v259
    %v267 = vadd.f32 %v266, %v264
    %s268 = scalar_lea.vmem [#allocation7], 968
    %269 = vst [vmem:[%s268] sm:$0xff] %v267
    %s270 = scalar_lea.vmem [#allocation4], 976
    %v271 = vld [vmem:[%s270] sm:$0xff]
    %v272 = vmul.f32 %v112, %v271
    %v273 = vsub.f32 1.0, %v112
    %v274 = vmul.f32 %v273, %v267
    %v275 = vadd.f32 %v274, %v272
    %s276 = scalar_lea.vmem [#allocation7], 976
    %277 = vst [vmem:[%s276] sm:$0xff] %v275
    %s278 = scalar_lea.vmem [#allocation4], 984
    %v279 = vld [vmem:[%s278] sm:$0xff]
    %v280 = vmul.f32 %v113, %v279
    %v281 = vsub.f32 1.0, %v113
    %v282 = vmul.f32 %v281, %v275
    %v283 = vadd.f32 %v282, %v280
    %s284 = scalar_lea.vmem [#allocation7], 984
    %285 = vst [vmem:[%s284] sm:$0xff] %v283
    %s286 = scalar_lea.vmem [#allocation4], 992
    %v287 = vld [vmem:[%s286] sm:$0xff]
    %v288 = vmul.f32 %v114, %v287
    %v289 = vsub.f32 1.0, %v114
    %v290 = vmul.f32 %v289, %v283
    %v291 = vadd.f32 %v290, %v288
    %s292 = scalar_lea.vmem [#allocation7], 992
    %293 = vst [vmem:[%s292] sm:$0xff] %v291
    %s294 = scalar_lea.vmem [#allocation4], 1000
    %v295 = vld [vmem:[%s294] sm:$0xff]
    %v296 = vmul.f32 %v115, %v295
    %v297 = vsub.f32 1.0, %v115
    %v298 = vmul.f32 %v297, %v291
    %v299 = vadd.f32 %v298, %v296
    %s300 = scalar_lea.vmem [#allocation7], 1000
    %301 = vst [vmem:[%s300] sm:$0xff] %v299
    %s302 = scalar_lea.vmem [#allocation4], 1008
    %v303 = vld [vmem:[%s302] sm:$0xff]
    %v304 = vmul.f32 %v116, %v303
    %v305 = vsub.f32 1.0, %v116
    %v306 = vmul.f32 %v305, %v299
    %v307 = vadd.f32 %v306, %v304
    %s308 = scalar_lea.vmem [#allocation7], 1008
    %309 = vst [vmem:[%s308] sm:$0xff] %v307
    %s310 = scalar_lea.vmem [#allocation4], 1016
    %v311 = vld [vmem:[%s310] sm:$0xff]
    %v312 = vmul.f32 %v117, %v311
    %v313 = vsub.f32 1.0, %v117
    %v314 = vmul.f32 %v313, %v307
    %v315 = vadd.f32 %v314, %v312
    %s316 = scalar_lea.vmem [#allocation7], 1016
    %317 = vst [vmem:[%s316] sm:$0xff] %v315
    %318 = vst [vmem:[#allocation2] sm:$0xff] %v315
    %319 = vst [vmem:[#allocation3] sm:$0xff] %v109
    // Predicated region
    $region37: #{tpu_custom_call.1} parent=1 // pred_check
      _
    $region38: #{tpu_custom_call.1} parent=1 // pred_check_branch
      %321 = sbr.rel (0) target = $region40
    $region39: #{tpu_custom_call.1} parent=1 // pred_region
      %s323 = ssub.s32 16384, 16384
      %324 = vsyncadd [#allocation6], %s323
      %s325 = sshll.u32 [#allocation7], 4
      %s326 = int_to_ptr.vmem [resolvable:$true] %s325
      %331 = dma.vmem_to_hbm [thread:$0]  %s326, 16384, %s5, [#allocation6], 128, 128, 8
    $region40: #{tpu_custom_call.1} parent=1 // pred_fallthru
      _
    // Predicated region
    $region41: #{tpu_custom_call.1} parent=1 // pred_check
      _
    $region42: #{tpu_custom_call.1} parent=1 // pred_check_branch
      %333 = sbr.rel (0) target = $region44
    $region43: #{tpu_custom_call.1} parent=1 // pred_region
      %334 = dma.done [#allocation6], 16384
    $region44: #{tpu_custom_call.1} parent=1 // pred_fallthru
      _
    %335 = vsyncpa [#allocation5], 1
    %336 = vsyncpa [#allocation6], 1

</llo_original>
